<compile_context>
chip_gen: v7x
topology: tpu7x:2x2x1
jax: 0.10.0
libtpu: 0.0.40
codegen_flags: <defaults>
</compile_context>

<pallas_src>
import functools

import jax
import jax.numpy as jnp
from jax.experimental import pallas as pl
from jax.experimental.pallas import tpu as pltpu


# ---------------------------------------------------------------------------
# Kernels
# ---------------------------------------------------------------------------

def _feature_transform_kernel(x_ref, w_ref, xw_ref):
    # (TM1, Fp) @ (Fp, Zp) -> (TM1, Zp); f32 accumulation on the MXU, bf16 store.
    xw_ref[...] = jnp.dot(x_ref[...], w_ref[...],
                          preferred_element_type=jnp.float32).astype(xw_ref.dtype)


def _aggregate_kernel(adj_ref, xw_ref, b_ref, out_ref, *, tk):
    # grid = (row blocks, reduction blocks); reduction axis last ("arbitrary").
    # out_ref's index_map ignores k, so it is resident across the reduction and
    # doubles as the f32 accumulator (no VMEM scratch, no final copy).
    k = pl.program_id(1)

    @pl.when(k == 0)
    def _():
        out_ref[...] = jnp.zeros_like(out_ref)

    # XW is fully VMEM-resident (constant index_map); slice the current K chunk.
    start = pl.multiple_of(k * tk, tk)
    xw_blk = xw_ref[pl.ds(start, tk), :]

    out_ref[...] += jnp.dot(adj_ref[...], xw_blk,
                            preferred_element_type=jnp.float32)

    @pl.when(k == pl.num_programs(1) - 1)
    def _():
        # Bias added once per output row block (not per reduction step).
        out_ref[...] += b_ref[...]


# ---------------------------------------------------------------------------
# Glue: normalized adjacency + wrapper
# ---------------------------------------------------------------------------

def _normalized_adjacency(edge_index: jnp.ndarray, num_nodes: int) -> jnp.ndarray:
    """Dense A_hat = D^{-1/2}(A + I)D^{-1/2} from a (2, E) edge_index."""
    src, dst = edge_index[0], edge_index[1]
    adj = jnp.zeros((num_nodes, num_nodes), jnp.float32)
    # Scatter-ADD (matches PyG GCNConv: duplicate edges accumulate weight).
    adj = adj.at[dst, src].add(1.0)                       # messages flow src -> dst
    # TODO(synk): PyG's add_remaining_self_loops keeps pre-existing self-loop weights
    # instead of adding 1 on top; we assume edge_index carries no explicit self-loops.
    adj = adj + jnp.eye(num_nodes, dtype=jnp.float32)     # self-loops
    deg = adj.sum(axis=1)
    dinv = jnp.where(deg > 0, jax.lax.rsqrt(deg), 0.0)
    return dinv[:, None] * adj * dinv[None, :]


def _round_up(v: int, m: int) -> int:
    return (v + m - 1) // m * m


@functools.partial(jax.jit, static_argnames=("num_nodes",))
def _encoder_impl(adj_hat, x, w_packed, b_packed, num_nodes):
    n = num_nodes
    f = x.shape[1]
    two_z = w_packed.shape[1]

    # ---- Padded / lane-dense shapes -------------------------------------
    zp = max(128, _round_up(two_z, 128))        # lane-dense output width
    fp = max(128, _round_up(f, 128))            # lane-dense contraction dim for kernel 1

    # Decoupled row/col padding: rows to a multiple of tm, cols to a multiple of tk.
    if n <= 1024:
        tm = _round_up(n, 8)                    # single row block
        tk = _round_up(n, 128)                  # single reduction block
        np_rows, np_cols = tm, tk
    else:
        # Hot-loop tiles: 512x1024 bf16 adjacency tile = 1 MiB (amortizes per-step
        # pipeline overhead). Row grid length stays >= 2, so v7x's two TensorCores
        # can split the "parallel" axis.
        tm, tk = 512, 1024
        np_rows = _round_up(n, tm)
        np_cols = _round_up(n, tk)

    adj_p = jnp.zeros((np_rows, np_cols), jnp.float32).at[:n, :n].set(adj_hat)
    adj_p = adj_p.astype(jnp.bfloat16)          # halve the dominant HBM stream
    x_p = jnp.zeros((np_cols, fp), jnp.float32).at[:n, :f].set(x.astype(jnp.float32))
    w_p = jnp.zeros((fp, zp), jnp.float32).at[:f, :two_z].set(w_packed)
    b_p = jnp.zeros((1, zp), jnp.float32).at[:, :two_z].set(b_packed)

    # ---- Kernel 1: fused feature transform  XW = X @ [W_mu | W_logstd] --
    tm1 = 512 if np_cols % 512 == 0 else np_cols
    vmem1_need = 2 * (tm1 * fp * 4 + fp * zp * 4 + tm1 * zp * 2)
    vmem1_limit = min(64 * 1024 * 1024, max(2 * vmem1_need, 32 * 1024 * 1024))

    xw = pl.pallas_call(
        _feature_transform_kernel,
        out_shape=jax.ShapeDtypeStruct((np_cols, zp), jnp.bfloat16),
        grid=(np_cols // tm1,),
        in_specs=[
            pl.BlockSpec((tm1, fp), lambda i: (i, 0)),
            pl.BlockSpec((fp, zp), lambda i: (0, 0)),
        ],
        out_specs=pl.BlockSpec((tm1, zp), lambda i: (i, 0)),
        compiler_params=pltpu.CompilerParams(
            dimension_semantics=("parallel",),
            vmem_limit_bytes=vmem1_limit),
        cost_estimate=pl.CostEstimate(
            flops=2 * np_cols * fp * zp, transcendentals=0,
            bytes_accessed=4 * (np_cols * fp + fp * zp) + 2 * np_cols * zp),
    )(x_p, w_p)

    # ---- Kernel 2: tiled aggregation  out = A_hat @ XW + b --------------
    grid_rows = np_rows // tm
    grid_k = np_cols // tk

    # VMEM budget: adjacency double-buffer (bf16) + resident XW (bf16, counted
    # twice to be conservative) + output double-buffer (f32) + bias.
    vmem_need = (2 * tm * tk * 2
                 + 2 * np_cols * zp * 2
                 + 2 * tm * zp * 4
                 + 2 * zp * 4)
    vmem_limit = min(64 * 1024 * 1024, max(2 * vmem_need, 32 * 1024 * 1024))

    out_padded = pl.pallas_call(
        functools.partial(_aggregate_kernel, tk=tk),
        out_shape=jax.ShapeDtypeStruct((np_rows, zp), jnp.float32),
        grid_spec=pltpu.PrefetchScalarGridSpec(
            num_scalar_prefetch=0,
            grid=(grid_rows, grid_k),
            in_specs=[
                pl.BlockSpec((tm, tk), lambda i, k: (i, k)),      # adjacency tile (bf16)
                pl.BlockSpec((np_cols, zp), lambda i, k: (0, 0)),  # XW, VMEM-resident
                pl.BlockSpec((1, zp), lambda i, k: (0, 0)),        # fused bias
            ],
            out_specs=pl.BlockSpec((tm, zp), lambda i, k: (i, 0)),  # resident accumulator
        ),
        compiler_params=pltpu.CompilerParams(
            dimension_semantics=("parallel", "arbitrary"),
            vmem_limit_bytes=vmem_limit),
        cost_estimate=pl.CostEstimate(
            flops=2 * np_rows * np_cols * zp, transcendentals=0,
            bytes_accessed=(2 * np_rows * np_cols       # bf16 adjacency, streamed once
                            + 2 * np_cols * zp          # bf16 XW, fetched once (resident)
                            + 4 * np_rows * zp          # f32 output write
                            + 4 * zp)),                 # bias
    )(adj_p, xw, b_p)

    return out_padded


def variational_gcn_encoder(x, edge_index, params):
    """Returns (mu, logstd), each of shape (N, z_dim)."""
    n = x.shape[0]
    z_dim = params["w_mu"].shape[1]

    adj_hat = _normalized_adjacency(edge_index, n)

    # Fuse the two heads into a single weight / bias.
    w_packed = jnp.concatenate([params["w_mu"], params["w_logstd"]], axis=1)   # (F, 2Z)
    b_packed = jnp.concatenate([params["b_mu"], params["b_logstd"]], axis=1)   # (1, 2Z)

    out_padded = _encoder_impl(adj_hat, x, w_packed, b_packed, num_nodes=n)

    mu = out_padded[:n, :z_dim]
    logstd = out_padded[:n, z_dim:2 * z_dim]
    return mu, logstd


def init_params(key, in_channels, z_dim):
    k1, k2 = jax.random.split(key)
    scale = jnp.sqrt(6.0 / (in_channels + z_dim))
    return {
        "w_mu": jax.random.uniform(k1, (in_channels, z_dim), jnp.float32, -scale, scale),
        "b_mu": jnp.zeros((1, z_dim), jnp.float32),
        "w_logstd": jax.random.uniform(k2, (in_channels, z_dim), jnp.float32, -scale, scale),
        "b_logstd": jnp.zeros((1, z_dim), jnp.float32),
    }


if __name__ == "__main__":
    key = jax.random.PRNGKey(0)
    num_nodes = 8
    in_channels = 16
    z_dim = 8

    kx, kp = jax.random.split(key)
    x = jax.random.normal(kx, (num_nodes, in_channels), jnp.float32)

    # Deterministic bidirectional ring graph, edge_index shape (2, 2*N).
    idx = jnp.arange(num_nodes)
    src = jnp.concatenate([idx, (idx + 1) % num_nodes])
    dst = jnp.concatenate([(idx + 1) % num_nodes, idx])
    edge_index = jnp.stack([src, dst]).astype(jnp.int32)

    params = init_params(kp, in_channels, z_dim)

    mu, logstd = variational_gcn_encoder(x, edge_index, params)
    jax.block_until_ready((mu, logstd))

    # Pure-JAX f32 reference check (kernel uses bf16 adjacency/XW with f32
    # accumulation, so tolerance is loosened to ~1e-2).
    adj_hat = _normalized_adjacency(edge_index, num_nodes)
    mu_ref = adj_hat @ (x @ params["w_mu"]) + params["b_mu"]
    ls_ref = adj_hat @ (x @ params["w_logstd"]) + params["b_logstd"]
    assert jnp.allclose(mu, mu_ref, atol=2e-2, rtol=2e-2), "mu mismatch"
    assert jnp.allclose(logstd, ls_ref, atol=2e-2, rtol=2e-2), "logstd mismatch"
    assert mu.shape == (num_nodes, z_dim) and logstd.shape == (num_nodes, z_dim)

    print("KERNEL_OK")
</pallas_src>

<mosaic_0001>
module attributes {stable_mosaic.version = 11 : i64} {
  func.func @_feature_transform_kernel(%arg0: i32, %arg1: memref<128x128xf32, #tpu.memory_space<vmem>>, %arg2: memref<128x128xf32, #tpu.memory_space<vmem>>, %arg3: memref<128x128xbf16, #tpu.memory_space<vmem>>) attributes {dimension_semantics = [#tpu.dimension_semantics<parallel>], iteration_bounds = array<i64: 1>, scalar_prefetch = 0 : i64, scratch_operands = 0 : i64, tpu.core_type = #tpu.core_type<tc>, window_params = [{transform_indices = @transform_0, window_bounds = array<i64: 128, 128>}, {pipeline_mode = #tpu.pipeline_mode<synchronous>, transform_indices = @transform_1, window_bounds = array<i64: 128, 128>}, {transform_indices = @transform_2, window_bounds = array<i64: 128, 128>}]} {
    %c0 = arith.constant 0 : index
    %c0_0 = arith.constant 0 : index
    %0 = vector.load %arg1[%c0, %c0_0] : memref<128x128xf32, #tpu.memory_space<vmem>>, vector<128x128xf32>
    %c0_1 = arith.constant 0 : index
    %c0_2 = arith.constant 0 : index
    %1 = vector.load %arg2[%c0_1, %c0_2] : memref<128x128xf32, #tpu.memory_space<vmem>>, vector<128x128xf32>
    %cst = arith.constant dense<0.000000e+00> : vector<128x128xf32>
    %2 = tpu.matmul %0, %1, %cst {dimension_numbers = #tpu.dot_dimension_numbers<[1], [0], [0], [1], [0, 0, 1, 1], [], []>} : vector<128x128xf32>, vector<128x128xf32>, vector<128x128xf32> -> vector<128x128xf32>
    %3 = arith.truncf %2 : vector<128x128xf32> to vector<128x128xbf16>
    %c0_3 = arith.constant 0 : index
    %c0_4 = arith.constant 0 : index
    %4 = vector.load %arg3[%c0_3, %c0_4] : memref<128x128xbf16, #tpu.memory_space<vmem>>, vector<128x128xbf16>
    tpu.vector_store %arg3[%c0_3, %c0_4], %3 {strides = array<i32>} : memref<128x128xbf16, #tpu.memory_space<vmem>>, vector<128x128xbf16>,
    return
  }
  func.func @transform_0(%arg0: i32) -> (i32, i32) {
    %c0_i32 = arith.constant 0 : i32
    %c0_i32_0 = arith.constant 0 : i32
    return %arg0, %c0_i32 : i32, i32
  }
  func.func @transform_1(%arg0: i32) -> (i32, i32) {
    %c0_i32 = arith.constant 0 : i32
    %c0_i32_0 = arith.constant 0 : i32
    %c0_i32_1 = arith.constant 0 : i32
    return %c0_i32, %c0_i32_0 : i32, i32
  }
  func.func @transform_2(%arg0: i32) -> (i32, i32) {
    %c0_i32 = arith.constant 0 : i32
    %c0_i32_0 = arith.constant 0 : i32
    return %arg0, %c0_i32 : i32, i32
  }
}

module attributes {stable_mosaic.version = 11 : i64} {
  func.func @_aggregate_kernel(%arg0: i32, %arg1: i32, %arg2: memref<8x128xbf16, #tpu.memory_space<vmem>>, %arg3: memref<128x128xbf16, #tpu.memory_space<vmem>>, %arg4: memref<1x128xf32, #tpu.memory_space<vmem>>, %arg5: memref<8x128xf32, #tpu.memory_space<vmem>>) attributes {dimension_semantics = [#tpu.dimension_semantics<parallel>, #tpu.dimension_semantics<arbitrary>], iteration_bounds = array<i64: 1, 1>, scalar_prefetch = 0 : i64, scratch_operands = 0 : i64, tpu.core_type = #tpu.core_type<tc>, window_params = [{transform_indices = @transform_0, window_bounds = array<i64: 8, 128>}, {pipeline_mode = #tpu.pipeline_mode<synchronous>, transform_indices = @transform_1, window_bounds = array<i64: 128, 128>}, {pipeline_mode = #tpu.pipeline_mode<synchronous>, transform_indices = @transform_2, window_bounds = array<i64: 1, 128>}, {transform_indices = @transform_3, window_bounds = array<i64: 8, 128>}]} {
    %c0_i32 = arith.constant 0 : i32
    %0 = arith.cmpi eq, %arg1, %c0_i32 : i32
    %1 = arith.extui %0 : i1 to i32
    %c0_i32_0 = arith.constant 0 : i32
    %2 = arith.cmpi ne, %1, %c0_i32_0 : i32
    scf.if %2 {
      %cst_9 = arith.constant 0.000000e+00 : f32
      %15 = vector.broadcast %cst_9 : f32 to vector<8x128xf32>
      %c0_10 = arith.constant 0 : index
      %c0_11 = arith.constant 0 : index
      %16 = vector.load %arg5[%c0_10, %c0_11] : memref<8x128xf32, #tpu.memory_space<vmem>>, vector<8x128xf32>
      tpu.vector_store %arg5[%c0_10, %c0_11], %15 {strides = array<i32>} : memref<8x128xf32, #tpu.memory_space<vmem>>, vector<8x128xf32>,
    } else {
    }
    %c128_i32 = arith.constant 128 : i32
    %3 = arith.muli %arg1, %c128_i32 : i32
    %4 = tpu.assume_multiple %3, 128 : i32
    %5 = arith.index_cast %4 : i32 to index
    %c0 = arith.constant 0 : index
    %6 = vector.load %arg3[%5, %c0] : memref<128x128xbf16, #tpu.memory_space<vmem>>, vector<128x128xbf16>
    %c0_1 = arith.constant 0 : index
    %c0_2 = arith.constant 0 : index
    %7 = vector.load %arg5[%c0_1, %c0_2] : memref<8x128xf32, #tpu.memory_space<vmem>>, vector<8x128xf32>
    %c0_3 = arith.constant 0 : index
    %c0_4 = arith.constant 0 : index
    %8 = vector.load %arg2[%c0_3, %c0_4] : memref<8x128xbf16, #tpu.memory_space<vmem>>, vector<8x128xbf16>
    %cst = arith.constant dense<0.000000e+00> : vector<8x128xf32>
    %9 = tpu.matmul %8, %6, %cst {dimension_numbers = #tpu.dot_dimension_numbers<[1], [0], [0], [1], [0, 0, 1, 1], [], []>} : vector<8x128xbf16>, vector<128x128xbf16>, vector<8x128xf32> -> vector<8x128xf32>
    %10 = arith.addf %7, %9 : vector<8x128xf32>
    %c0_5 = arith.constant 0 : index
    %c0_6 = arith.constant 0 : index
    %11 = vector.load %arg5[%c0_5, %c0_6] : memref<8x128xf32, #tpu.memory_space<vmem>>, vector<8x128xf32>
    tpu.vector_store %arg5[%c0_5, %c0_6], %10 {strides = array<i32>} : memref<8x128xf32, #tpu.memory_space<vmem>>, vector<8x128xf32>,
    %c0_i32_7 = arith.constant 0 : i32
    %12 = arith.cmpi eq, %arg1, %c0_i32_7 : i32
    %13 = arith.extui %12 : i1 to i32
    %c0_i32_8 = arith.constant 0 : i32
    %14 = arith.cmpi ne, %13, %c0_i32_8 : i32
    scf.if %14 {
      %c0_9 = arith.constant 0 : index
      %c0_10 = arith.constant 0 : index
      %15 = vector.load %arg5[%c0_9, %c0_10] : memref<8x128xf32, #tpu.memory_space<vmem>>, vector<8x128xf32>
      %c0_11 = arith.constant 0 : index
      %c0_12 = arith.constant 0 : index
      %16 = vector.load %arg4[%c0_11, %c0_12] : memref<1x128xf32, #tpu.memory_space<vmem>>, vector<1x128xf32>
      %17 = vector.broadcast %16 : vector<1x128xf32> to vector<8x128xf32>
      %18 = arith.addf %15, %17 : vector<8x128xf32>
      %c0_13 = arith.constant 0 : index
      %c0_14 = arith.constant 0 : index
      %19 = vector.load %arg5[%c0_13, %c0_14] : memref<8x128xf32, #tpu.memory_space<vmem>>, vector<8x128xf32>
      tpu.vector_store %arg5[%c0_13, %c0_14], %18 {strides = array<i32>} : memref<8x128xf32, #tpu.memory_space<vmem>>, vector<8x128xf32>,
    } else {
    }
    return
  }
  func.func @transform_0(%arg0: i32, %arg1: i32) -> (i32, i32) {
    %c0_i32 = arith.constant 0 : i32
    return %arg0, %arg1 : i32, i32
  }
  func.func @transform_1(%arg0: i32, %arg1: i32) -> (i32, i32) {
    %c0_i32 = arith.constant 0 : i32
    %c0_i32_0 = arith.constant 0 : i32
    %c0_i32_1 = arith.constant 0 : i32
    return %c0_i32, %c0_i32_0 : i32, i32
  }
  func.func @transform_2(%arg0: i32, %arg1: i32) -> (i32, i32) {
    %c0_i32 = arith.constant 0 : i32
    %c0_i32_0 = arith.constant 0 : i32
    %c0_i32_1 = arith.constant 0 : i32
    return %c0_i32, %c0_i32_0 : i32, i32
  }
  func.func @transform_3(%arg0: i32, %arg1: i32) -> (i32, i32) {
    %c0_i32 = arith.constant 0 : i32
    %c0_i32_0 = arith.constant 0 : i32
    return %arg0, %c0_i32 : i32, i32
  }
}

</mosaic_0001>

<llo_original>
// kernel: _encoder_impl.2
$region0: #{_encoder_impl.2}
  #allocation0 [shape = 'u32[]', space=smem, size = 0x4, offset = 0x4, fixed_abs, tag = 'smem constant byte address 0x4 - core index']
  #allocation1 [shape = 'u32[144,128]{1,0:T(1,128)}', space=vmem, size = 0x12000, scoped, tag = 'internal scratch']
  %s0 = inlined_call_operand.vmem [shape: f32[128,128], index: 0, kind: input, shape index: {}]
  %s1 = inlined_call_operand.vmem [shape: f32[128,128], index: 1, kind: input, shape index: {}]
  %s2 = inlined_call_operand.vmem [shape: bf16[128,128], index: 2, kind: output, shape index: {}]
  %s3 = sld [smem:[#allocation0]]
  $region18: #{_encoder_impl.2} parent=0
    _
  %s5 = ssub.s32 1, %s3
  %s6 = scalar_select 0, %s5, %s3
  // Predicated region
  $region2: #{_encoder_impl.2} parent=0 // pred_check
    _
  $region3: #{_encoder_impl.2} parent=0 // pred_check_branch
    %8 = sbr.rel (0) target = $region5
  $region4: #{_encoder_impl.2} parent=0 // pred_region
    _
  $region5: #{_encoder_impl.2} parent=0 // pred_fallthru
    _
  // Predicated region
  $region6: #{_encoder_impl.2} parent=0 // pred_check
    _
  $region7: #{_encoder_impl.2} parent=0 // pred_check_branch
    %10 = sbr.rel (0) target = $region9
  $region8: #{_encoder_impl.2} parent=0 // pred_region
    _
  $region9: #{_encoder_impl.2} parent=0 // pred_fallthru
    _
  %v11 = vld [vmem:[%s0] sm:$0xff]
  %v12 = vld [vmem:[%s0 + $0x8] sm:$0xff]
  %v13 = vld [vmem:[%s0 + $0x10] sm:$0xff]
  %v14 = vld [vmem:[%s0 + $0x18] sm:$0xff]
  %v15 = vld [vmem:[%s0 + $0x20] sm:$0xff]
  %v16 = vld [vmem:[%s0 + $0x28] sm:$0xff]
  %v17 = vld [vmem:[%s0 + $0x30] sm:$0xff]
  %v18 = vld [vmem:[%s0 + $0x38] sm:$0xff]
  %v19 = vld [vmem:[%s0 + $0x40] sm:$0xff]
  %v20 = vld [vmem:[%s0 + $0x48] sm:$0xff]
  %v21 = vld [vmem:[%s0 + $0x50] sm:$0xff]
  %v22 = vld [vmem:[%s0 + $0x58] sm:$0xff]
  %v23 = vld [vmem:[%s0 + $0x60] sm:$0xff]
  %v24 = vld [vmem:[%s0 + $0x68] sm:$0xff]
  %v25 = vld [vmem:[%s0 + $0x70] sm:$0xff]
  %v26 = vld [vmem:[%s0 + $0x78] sm:$0xff]
  %v27 = vld [vmem:[%s1] sm:$0xff]
  %v28 = vld [vmem:[%s1 + $0x8] sm:$0xff]
  %v29 = vld [vmem:[%s1 + $0x10] sm:$0xff]
  %v30 = vld [vmem:[%s1 + $0x18] sm:$0xff]
  %v31 = vld [vmem:[%s1 + $0x20] sm:$0xff]
  %v32 = vld [vmem:[%s1 + $0x28] sm:$0xff]
  %v33 = vld [vmem:[%s1 + $0x30] sm:$0xff]
  %v34 = vld [vmem:[%s1 + $0x38] sm:$0xff]
  %v35 = vld [vmem:[%s1 + $0x40] sm:$0xff]
  %v36 = vld [vmem:[%s1 + $0x48] sm:$0xff]
  %v37 = vld [vmem:[%s1 + $0x50] sm:$0xff]
  %v38 = vld [vmem:[%s1 + $0x58] sm:$0xff]
  %v39 = vld [vmem:[%s1 + $0x60] sm:$0xff]
  %v40 = vld [vmem:[%s1 + $0x68] sm:$0xff]
  %v41 = vld [vmem:[%s1 + $0x70] sm:$0xff]
  %v42 = vld [vmem:[%s1 + $0x78] sm:$0xff]
  %43 = vmatprep.subr.mxu0 0.0
  %44 = vmatpush1.msra.mxu0 %v27
  %45 = vmatprep.subr.mxu0 0.0
  %46 = vmatpush1.msra.mxu0 %v28
  %47 = vmatprep.subr.mxu0 0.0
  %48 = vmatpush1.msra.mxu0 %v29
  %49 = vmatprep.subr.mxu0 0.0
  %50 = vmatpush1.msra.mxu0 %v30
  %51 = vmatprep.subr.mxu0 0.0
  %52 = vmatpush1.msra.mxu0 %v31
  %53 = vmatprep.subr.mxu0 0.0
  %54 = vmatpush1.msra.mxu0 %v32
  %55 = vmatprep.subr.mxu0 0.0
  %56 = vmatpush1.msra.mxu0 %v33
  %57 = vmatprep.subr.mxu0 0.0
  %58 = vmatpush1.msra.mxu0 %v34
  %59 = vmatprep.subr.mxu0 0.0
  %60 = vmatpush1.msra.mxu0 %v35
  %61 = vmatprep.subr.mxu0 0.0
  %62 = vmatpush1.msra.mxu0 %v36
  %63 = vmatprep.subr.mxu0 0.0
  %64 = vmatpush1.msra.mxu0 %v37
  %65 = vmatprep.subr.mxu0 0.0
  %66 = vmatpush1.msra.mxu0 %v38
  %67 = vmatprep.subr.mxu0 0.0
  %68 = vmatpush1.msra.mxu0 %v39
  %69 = vmatprep.subr.mxu0 0.0
  %70 = vmatpush1.msra.mxu0 %v40
  %71 = vmatprep.subr.mxu0 0.0
  %72 = vmatpush1.msra.mxu0 %v41
  %73 = vmatprep.subr.mxu0 0.0
  %74 = vmatpush1.msra.mxu0 %v42
  %75 = vmatprep.subr.mxu0 0.0
  %76 = vmatpush1.msra.mxu0 0.0
  %77 = vmatprep.subr.mxu0 0.0
  %78 = vmatpush1.msra.mxu0 0.0
  %79 = vmatprep.subr.mxu0 0.0
  %80 = vmatpush1.msra.mxu0 0.0
  %81 = vmatprep.subr.mxu0 0.0
  %82 = vmatpush1.msra.mxu0 0.0
  %83 = vmatprep.subr.mxu0 0.0
  %84 = vmatpush1.msra.mxu0 0.0
  %85 = vmatprep.subr.mxu0 0.0
  %86 = vmatpush1.msra.mxu0 0.0
  %87 = vmatprep.subr.mxu0 0.0
  %88 = vmatpush1.msra.mxu0 0.0
  %89 = vmatprep.subr.mxu0 0.0
  %90 = vmatpush1.msra.mxu0 0.0
  %91 = vmatprep.subr.mxu0 0.0
  %92 = vmatpush1.msra.mxu0 0.0
  %93 = vmatprep.subr.mxu0 0.0
  %94 = vmatpush1.msra.mxu0 0.0
  %95 = vmatprep.subr.mxu0 0.0
  %96 = vmatpush1.msra.mxu0 0.0
  %97 = vmatprep.subr.mxu0 0.0
  %98 = vmatpush1.msra.mxu0 0.0
  %99 = vmatprep.subr.mxu0 0.0
  %100 = vmatpush1.msra.mxu0 0.0
  %101 = vmatprep.subr.mxu0 0.0
  %102 = vmatpush1.msra.mxu0 0.0
  %103 = vmatprep.subr.mxu0 0.0
  %104 = vmatpush1.msra.mxu0 0.0
  %105 = vmatprep.subr.mxu0 0.0
  %106 = vmatpush1.msra.mxu0 0.0
  %107 = vmatprep.mubr.f32.mxu0 0.0
  %108 = vmatmul.mubr.f32.gmra.mrb[0].mxu0 %v11
  %v109 = vpop.f32.mrb[0].mxu0
  %v110 = vadd.f32 0.0, %v109
  %v111 = vpop.f32.mrb[0].mxu0
  %112 = vmatprep.mubr.f32.mxu0 0.0
  %113 = vmatmul.mubr.f32.gmra.mrb[0].mxu0 %v12
  %v114 = vpop.f32.mrb[0].mxu0
  %v115 = vadd.f32 0.0, %v114
  %v116 = vpop.f32.mrb[0].mxu0
  %117 = vmatprep.mubr.f32.mxu0 0.0
  %118 = vmatmul.mubr.f32.gmra.mrb[0].mxu0 %v13
  %v119 = vpop.f32.mrb[0].mxu0
  %v120 = vadd.f32 0.0, %v119
  %v121 = vpop.f32.mrb[0].mxu0
  %122 = vmatprep.mubr.f32.mxu0 0.0
  %123 = vmatmul.mubr.f32.gmra.mrb[0].mxu0 %v14
  %v124 = vpop.f32.mrb[0].mxu0
  %v125 = vadd.f32 0.0, %v124
  %v126 = vpop.f32.mrb[0].mxu0
  %127 = vmatprep.mubr.f32.mxu0 0.0
  %128 = vmatmul.mubr.f32.gmra.mrb[0].mxu0 %v15
  %v129 = vpop.f32.mrb[0].mxu0
  %v130 = vadd.f32 0.0, %v129
  %v131 = vpop.f32.mrb[0].mxu0
  %132 = vmatprep.mubr.f32.mxu0 0.0
  %133 = vmatmul.mubr.f32.gmra.mrb[0].mxu0 %v16
  %v134 = vpop.f32.mrb[0].mxu0
  %v135 = vadd.f32 0.0, %v134
  %v136 = vpop.f32.mrb[0].mxu0
  %137 = vmatprep.mubr.f32.mxu0 0.0
  %138 = vmatmul.mubr.f32.gmra.mrb[0].mxu0 %v17
  %v139 = vpop.f32.mrb[0].mxu0
  %v140 = vadd.f32 0.0, %v139
  %v141 = vpop.f32.mrb[0].mxu0
  %142 = vmatprep.mubr.f32.mxu0 0.0
  %143 = vmatmul.mubr.f32.gmra.mrb[0].mxu0 %v18
  %v144 = vpop.f32.mrb[0].mxu0
  %v145 = vadd.f32 0.0, %v144
  %v146 = vpop.f32.mrb[0].mxu0
  %147 = vmatprep.mubr.f32.mxu0 0.0
  %148 = vmatmul.mubr.f32.gmra.mrb[0].mxu0 %v19
  %v149 = vpop.f32.mrb[0].mxu0
  %v150 = vadd.f32 0.0, %v149
  %v151 = vpop.f32.mrb[0].mxu0
  %152 = vmatprep.mubr.f32.mxu0 0.0
  %153 = vmatmul.mubr.f32.gmra.mrb[0].mxu0 %v20
  %v154 = vpop.f32.mrb[0].mxu0
  %v155 = vadd.f32 0.0, %v154
  %v156 = vpop.f32.mrb[0].mxu0
  %157 = vmatprep.mubr.f32.mxu0 0.0
  %158 = vmatmul.mubr.f32.gmra.mrb[0].mxu0 %v21
  %v159 = vpop.f32.mrb[0].mxu0
  %v160 = vadd.f32 0.0, %v159
  %v161 = vpop.f32.mrb[0].mxu0
  %162 = vmatprep.mubr.f32.mxu0 0.0
  %163 = vmatmul.mubr.f32.gmra.mrb[0].mxu0 %v22
  %v164 = vpop.f32.mrb[0].mxu0
  %v165 = vadd.f32 0.0, %v164
  %v166 = vpop.f32.mrb[0].mxu0
  %167 = vmatprep.mubr.f32.mxu0 0.0
  %168 = vmatmul.mubr.f32.gmra.mrb[0].mxu0 %v23
  %v169 = vpop.f32.mrb[0].mxu0
  %v170 = vadd.f32 0.0, %v169
  %v171 = vpop.f32.mrb[0].mxu0
  %172 = vmatprep.mubr.f32.mxu0 0.0
  %173 = vmatmul.mubr.f32.gmra.mrb[0].mxu0 %v24
  %v174 = vpop.f32.mrb[0].mxu0
  %v175 = vadd.f32 0.0, %v174
  %v176 = vpop.f32.mrb[0].mxu0
  %177 = vmatprep.mubr.f32.mxu0 0.0
  %178 = vmatmul.mubr.f32.gmra.mrb[0].mxu0 %v25
  %v179 = vpop.f32.mrb[0].mxu0
  %v180 = vadd.f32 0.0, %v179
  %v181 = vpop.f32.mrb[0].mxu0
  %182 = vmatprep.mubr.f32.mxu0 0.0
  %183 = vmatmul.mubr.f32.gmra.mrb[0].mxu0 %v26
  %v184 = vpop.f32.mrb[0].mxu0
  %v185 = vadd.f32 0.0, %v184
  %v186 = vpop.f32.mrb[0].mxu0
  %187 = vdwg.mxu0
  %v188 = vpack.c.bf16 %v115, %v110
  %v189 = vpack.c.bf16 %v125, %v120
  %v190 = vpack.c.bf16 %v135, %v130
  %v191 = vpack.c.bf16 %v145, %v140
  %v192 = vpack.c.bf16 %v155, %v150
  %v193 = vpack.c.bf16 %v165, %v160
  %v194 = vpack.c.bf16 %v175, %v170
  %v195 = vpack.c.bf16 %v185, %v180
  %v204 = vunpack.c.l.b16 %v188
  %v205 = vunpack.c.h.b16 %v188
  %v206 = vunpack.c.l.b16 %v189
  %v207 = vunpack.c.h.b16 %v189
  %v208 = vunpack.c.l.b16 %v190
  %v209 = vunpack.c.h.b16 %v190
  %v210 = vunpack.c.l.b16 %v191
  %v211 = vunpack.c.h.b16 %v191
  %v212 = vunpack.c.l.b16 %v192
  %v213 = vunpack.c.h.b16 %v192
  %v214 = vunpack.c.l.b16 %v193
  %v215 = vunpack.c.h.b16 %v193
  %v216 = vunpack.c.l.b16 %v194
  %v217 = vunpack.c.h.b16 %v194
  %v218 = vunpack.c.l.b16 %v195
  %v219 = vunpack.c.h.b16 %v195
  %v220 = vpack.c.b16 %v204, %v204
  %v221 = vpack.c.b16 %v205, %v205
  %v222 = vpack.c.b16 %v206, %v206
  %v223 = vpack.c.b16 %v207, %v207
  %v224 = vpack.c.b16 %v208, %v208
  %v225 = vpack.c.b16 %v209, %v209
  %v226 = vpack.c.b16 %v210, %v210
  %v227 = vpack.c.b16 %v211, %v211
  %v228 = vpack.c.b16 %v212, %v212
  %v229 = vpack.c.b16 %v213, %v213
  %v230 = vpack.c.b16 %v214, %v214
  %v231 = vpack.c.b16 %v215, %v215
  %v232 = vpack.c.b16 %v216, %v216
  %v233 = vpack.c.b16 %v217, %v217
  %v234 = vpack.c.b16 %v218, %v218
  %v235 = vpack.c.b16 %v219, %v219
  %252 = vst [vmem:[%s2] sm:$0xf] %v220
  %253 = vst [vmem:[%s2 + $0x4] sm:$0xf] %v221
  %254 = vst [vmem:[%s2 + $0x8] sm:$0xf] %v222
  %255 = vst [vmem:[%s2 + $0xc] sm:$0xf] %v223
  %256 = vst [vmem:[%s2 + $0x10] sm:$0xf] %v224
  %257 = vst [vmem:[%s2 + $0x14] sm:$0xf] %v225
  %258 = vst [vmem:[%s2 + $0x18] sm:$0xf] %v226
  %259 = vst [vmem:[%s2 + $0x1c] sm:$0xf] %v227
  %260 = vst [vmem:[%s2 + $0x20] sm:$0xf] %v228
  %261 = vst [vmem:[%s2 + $0x24] sm:$0xf] %v229
  %262 = vst [vmem:[%s2 + $0x28] sm:$0xf] %v230
  %263 = vst [vmem:[%s2 + $0x2c] sm:$0xf] %v231
  %264 = vst [vmem:[%s2 + $0x30] sm:$0xf] %v232
  %265 = vst [vmem:[%s2 + $0x34] sm:$0xf] %v233
  %266 = vst [vmem:[%s2 + $0x38] sm:$0xf] %v234
  %267 = vst [vmem:[%s2 + $0x3c] sm:$0xf] %v235
  // Predicated region
  $region10: #{_encoder_impl.2} parent=0 // pred_check
    _
  $region11: #{_encoder_impl.2} parent=0 // pred_check_branch
    %269 = sbr.rel (0) target = $region13
  $region12: #{_encoder_impl.2} parent=0 // pred_region
    _
  $region13: #{_encoder_impl.2} parent=0 // pred_fallthru
    _
  // Predicated region
  $region14: #{_encoder_impl.2} parent=0 // pred_check
    _
  $region15: #{_encoder_impl.2} parent=0 // pred_check_branch
    %271 = sbr.rel (0) target = $region17
  $region16: #{_encoder_impl.2} parent=0 // pred_region
    _
  $region17: #{_encoder_impl.2} parent=0 // pred_fallthru
    _

// kernel: _encoder_impl.3
$region0: #{_encoder_impl.3}
  #allocation0 [shape = 'u32[]', space=smem, size = 0x4, offset = 0x4, fixed_abs, tag = 'smem constant byte address 0x4 - core index']
  #allocation1 [shape = 'u32[144,128]{1,0:T(1,128)}', space=vmem, size = 0x12000, scoped, tag = 'internal scratch']
  %s0 = inlined_call_operand.vmem [shape: bf16[8,128], index: 0, kind: input, shape index: {}]
  %s1 = inlined_call_operand.vmem [shape: bf16[128,128], index: 1, kind: input, shape index: {}]
  %s2 = inlined_call_operand.vmem [shape: f32[1,128], index: 2, kind: input, shape index: {}]
  %s3 = inlined_call_operand.hbm [shape: f32[8,128], index: 3, kind: output, shape index: {}]
  %s4 = sld [smem:[#allocation0]]
  $region30: #{_encoder_impl.3} parent=0
    _
  %s6 = ssub.s32 1, %s4
  %s7 = scalar_select 0, %s6, %s4
  $region1: #{_encoder_impl.3} parent=0
    #allocation2 [shape = 'u8[4096]{0}', space=vmem, size = 0x1000, scoped, tag = 'output window, operand 0, single buffered']
    #allocation3 [shape = 's32[1]{0}', space=sflag, size = 0x4, scoped, tag = 'scoped memory for _encoder_impl.3']
    %8 = vsyncpa [#allocation3], 0
    // Predicated region
    $region2: #{_encoder_impl.3} parent=1 // pred_check
      _
    $region3: #{_encoder_impl.3} parent=1 // pred_check_branch
      %10 = sbr.rel (0) target = $region5
    $region4: #{_encoder_impl.3} parent=1 // pred_region
      _
    $region5: #{_encoder_impl.3} parent=1 // pred_fallthru
      _
    // Predicated region
    $region6: #{_encoder_impl.3} parent=1 // pred_check
      _
    $region7: #{_encoder_impl.3} parent=1 // pred_check_branch
      %12 = sbr.rel (0) target = $region9
    $region8: #{_encoder_impl.3} parent=1 // pred_region
      _
    $region9: #{_encoder_impl.3} parent=1 // pred_fallthru
      _
    // Predicated region
    $region10: #{_encoder_impl.3} parent=1 // pred_check
      _
    $region11: #{_encoder_impl.3} parent=1 // pred_check_branch
      %14 = sbr.rel (0) target = $region13
    $region12: #{_encoder_impl.3} parent=1 // pred_region
      _
    $region13: #{_encoder_impl.3} parent=1 // pred_fallthru
      _
    %p16 = scmp.eq.s32.totalorder 0, 0
    // Predicated region
    $region14: #{_encoder_impl.3} parent=1 // pred_check
      %p17 = pneg %p16
    $region15: #{_encoder_impl.3} parent=1 // pred_check_branch
      %19 = sbr.rel (%p17) target = $region17
    $region16: #{_encoder_impl.3} parent=1 // pred_region
      %20 = vst [vmem:[#allocation2] sm:$0xff] 0.0
    $region17: #{_encoder_impl.3} parent=1 // pred_fallthru
      _
    %s21 = smul.u32 0, 128
    %s22 = sshra.s32 %s21, 3
    %s23 = sand.u32 %s21, 7
    %s24 = smul.addr %s22, 4
    %s25 = scalar_lea.vmem %s1, %s24
    %v26 = vld [vmem:[%s25] sm:$0xf]
    %v27 = vld [vmem:[%s25 + $0x4] sm:$0xf]
    %v28 = vld [vmem:[%s25 + $0x8] sm:$0xf]
    %v29 = vld [vmem:[%s25 + $0xc] sm:$0xf]
    %v30 = vld [vmem:[%s25 + $0x10] sm:$0xf]
    %v31 = vld [vmem:[%s25 + $0x14] sm:$0xf]
    %v32 = vld [vmem:[%s25 + $0x18] sm:$0xf]
    %v33 = vld [vmem:[%s25 + $0x1c] sm:$0xf]
    %v34 = vld [vmem:[%s25 + $0x20] sm:$0xf]
    %v35 = vld [vmem:[%s25 + $0x24] sm:$0xf]
    %v36 = vld [vmem:[%s25 + $0x28] sm:$0xf]
    %v37 = vld [vmem:[%s25 + $0x2c] sm:$0xf]
    %v38 = vld [vmem:[%s25 + $0x30] sm:$0xf]
    %v39 = vld [vmem:[%s25 + $0x34] sm:$0xf]
    %v40 = vld [vmem:[%s25 + $0x38] sm:$0xf]
    %v41 = vld [vmem:[%s25 + $0x3c] sm:$0xf]
    %v42 = vld [vmem:[#allocation2] sm:$0xff]
    %v43 = vld [vmem:[%s0] sm:$0xf]
    %v60 = vunpack.c.l.b16 %v26
    %v61 = vunpack.c.l.b16 %v27
    %v62 = vunpack.c.l.b16 %v28
    %v63 = vunpack.c.l.b16 %v29
    %v64 = vunpack.c.l.b16 %v30
    %v65 = vunpack.c.l.b16 %v31
    %v66 = vunpack.c.l.b16 %v32
    %v67 = vunpack.c.l.b16 %v33
    %v68 = vunpack.c.l.b16 %v34
    %v69 = vunpack.c.l.b16 %v35
    %v70 = vunpack.c.l.b16 %v36
    %v71 = vunpack.c.l.b16 %v37
    %v72 = vunpack.c.l.b16 %v38
    %v73 = vunpack.c.l.b16 %v39
    %v74 = vunpack.c.l.b16 %v40
    %v75 = vunpack.c.l.b16 %v41
    %v76 = vpack.c.b16 %v61, %v60
    %v77 = vpack.c.b16 %v63, %v62
    %v78 = vpack.c.b16 %v65, %v64
    %v79 = vpack.c.b16 %v67, %v66
    %v80 = vpack.c.b16 %v69, %v68
    %v81 = vpack.c.b16 %v71, %v70
    %v82 = vpack.c.b16 %v73, %v72
    %v83 = vpack.c.b16 %v75, %v74
    %92 = vmatprep.subr.bf16.mxu0 0
    %93 = vmatpush1.bf16.msra.mxu0 %v76
    %94 = vmatprep.subr.bf16.mxu0 0
    %95 = vmatpush1.bf16.msra.mxu0 %v77
    %96 = vmatprep.subr.bf16.mxu0 0
    %97 = vmatpush1.bf16.msra.mxu0 %v78
    %98 = vmatprep.subr.bf16.mxu0 0
    %99 = vmatpush1.bf16.msra.mxu0 %v79
    %100 = vmatprep.subr.bf16.mxu0 0
    %101 = vmatpush1.bf16.msra.mxu0 %v80
    %102 = vmatprep.subr.bf16.mxu0 0
    %103 = vmatpush1.bf16.msra.mxu0 %v81
    %104 = vmatprep.subr.bf16.mxu0 0
    %105 = vmatpush1.bf16.msra.mxu0 %v82
    %106 = vmatprep.subr.bf16.mxu0 0
    %107 = vmatpush1.bf16.msra.mxu0 %v83
    %108 = vmatprep.subr.bf16.mxu0 0
    %109 = vmatpush1.bf16.msra.mxu0 0
    %110 = vmatprep.subr.bf16.mxu0 0
    %111 = vmatpush1.bf16.msra.mxu0 0
    %112 = vmatprep.subr.bf16.mxu0 0
    %113 = vmatpush1.bf16.msra.mxu0 0
    %114 = vmatprep.subr.bf16.mxu0 0
    %115 = vmatpush1.bf16.msra.mxu0 0
    %116 = vmatprep.subr.bf16.mxu0 0
    %117 = vmatpush1.bf16.msra.mxu0 0
    %118 = vmatprep.subr.bf16.mxu0 0
    %119 = vmatpush1.bf16.msra.mxu0 0
    %120 = vmatprep.subr.bf16.mxu0 0
    %121 = vmatpush1.bf16.msra.mxu0 0
    %122 = vmatprep.subr.bf16.mxu0 0
    %123 = vmatpush1.bf16.msra.mxu0 0
    %124 = vmatprep.mubr.bf16.mxu0 0
    %125 = vmatmul.mubr.bf16.gmra.mrb[0].mxu0 %v43
    %v126 = vpop.f32.mrb[0].mxu0
    %v127 = vadd.f32 0.0, %v126
    %v128 = vpop.f32.mrb[0].mxu0
    %v129 = vpop.f32.mrb[0].mxu0
    %v130 = vpop.f32.mrb[0].mxu0
    %131 = vdwg.mxu0
    %v132 = vadd.f32 %v42, %v127
    %133 = vst [vmem:[#allocation2] sm:$0xff] %v132
    // Predicated region
    $region18: #{_encoder_impl.3} parent=1 // pred_check
      %p134 = pneg %p16
    $region19: #{_encoder_impl.3} parent=1 // pred_check_branch
      %136 = sbr.rel (%p134) target = $region21
    $region20: #{_encoder_impl.3} parent=1 // pred_region
      %v137 = vld [vmem:[#allocation2] sm:$0xff]
      %v138 = vld [vmem:[%s2] sm:$0x1]
      %v140 = vlaneseq
      %v141 = vshrl.u32 %v140, 7
      %v142 = vsub.s32 0, %v141
      %v143 = vrot.slane %v138, %v142
      %v145 = vadd.f32 %v137, %v143
      %146 = vst [vmem:[#allocation2] sm:$0xff] %v145
    $region21: #{_encoder_impl.3} parent=1 // pred_fallthru
      _
    // Predicated region
    $region22: #{_encoder_impl.3} parent=1 // pred_check
      _
    $region23: #{_encoder_impl.3} parent=1 // pred_check_branch
      %148 = sbr.rel (0) target = $region25
    $region24: #{_encoder_impl.3} parent=1 // pred_region
      %s150 = ssub.s32 128, 128
      %151 = vsyncadd [#allocation3], %s150
      %s153 = sshll.u32 [#allocation2], 4
      %s154 = int_to_ptr.vmem [resolvable:$true] %s153
      %156 = dma.vmem_to_hbm [thread:$0]  %s154, 128, %s3, [#allocation3]
    $region25: #{_encoder_impl.3} parent=1 // pred_fallthru
      _
    // Predicated region
    $region26: #{_encoder_impl.3} parent=1 // pred_check
      _
    $region27: #{_encoder_impl.3} parent=1 // pred_check_branch
      %158 = sbr.rel (0) target = $region29
    $region28: #{_encoder_impl.3} parent=1 // pred_region
      %159 = dma.done [#allocation3], 128
    $region29: #{_encoder_impl.3} parent=1 // pred_fallthru
      _
    %160 = vsyncpa [#allocation3], 1

</llo_original>
